<compile_context>
chip_gen: v7x
topology: tpu7x:2x2x1
jax: 0.10.0
libtpu: 0.0.40
codegen_flags: <defaults>
</compile_context>

<pallas_src>
import functools
import math

import jax
import jax.numpy as jnp
from jax.experimental import pallas as pl
from jax.experimental.pallas import tpu as pltpu

_NEG = -1e30  # "minus infinity" that stays finite (no inf/NaN arithmetic)


def _ncl_stream_kernel(q_ref, k_ref, mem_ref, loss_ref,
                       qs_ref, lpos_ref, m_ref, l_ref, cand_ref, *,
                       inv_T, w_pos, knn, knn_pad, compute_dtype):
    """Fused streaming NCL loss.

    Scratch state carried across the K-tile grid axis:
      qs_ref   : (B, D)       q * (1/T) in MXU compute dtype (written once)
      lpos_ref : (B, 1)  f32  positive logit / T
      m_ref    : (B, 1)  f32  running row max over all logits seen so far
      l_ref    : (B, 1)  f32  running sum-exp (relative to m_ref)
      cand_ref : (B, knn_pad) f32  top-knn *negative* logits seen so far
                              (slots >= knn stay at -1e30)
    """
    kk = pl.program_id(0)
    last = pl.num_programs(0) - 1

    # ---- once (first tile): scale q, positive logit, init running state ----
    @pl.when(kk == 0)
    def _():
        qf = q_ref[...].astype(jnp.float32) * inv_T                 # (B, D)
        qs_ref[...] = qf.astype(compute_dtype)
        # NOTE: l_pos stays f32 even on the bf16-MXU path (cheap: B*D on VPU);
        # validated against the f32 reference at the real temperature below.
        lpos = jnp.sum(qf * k_ref[...].astype(jnp.float32),
                       axis=1, keepdims=True)                       # (B, 1)
        lpos_ref[...] = lpos
        m_ref[...] = lpos                    # running max seeded with positive
        l_ref[...] = jnp.ones_like(l_ref)    # exp(lpos - lpos) == 1
        cand_ref[...] = jnp.full_like(cand_ref, _NEG)
        loss_ref[...] = jnp.zeros_like(loss_ref)

    # ---- per-tile MXU matmul for this memory slice ----
    s = jax.lax.dot_general(                                        # (B, tk) f32
        qs_ref[...], mem_ref[...].astype(compute_dtype),
        dimension_numbers=(((1,), (1,)), ((), ())),
        preferred_element_type=jnp.float32)

    # ---- online softmax update (flash-style rescale) ----
    m_old = m_ref[...]
    m_new = jnp.maximum(m_old, jnp.max(s, axis=1, keepdims=True))
    l_ref[...] = (l_ref[...] * jnp.exp(m_old - m_new)
                  + jnp.sum(jnp.exp(s - m_new), axis=1, keepdims=True))
    m_ref[...] = m_new

    # ---- streaming exact top-knn merge: top-knn(cand U tile) -> cand ----
    work = jnp.concatenate([cand_ref[...], s], axis=1)              # (B, W)
    W = work.shape[1]
    col = jax.lax.broadcasted_iota(jnp.int32, (1, W), 1)
    slot = jax.lax.broadcasted_iota(jnp.int32, (1, knn_pad), 1)

    def body(i, carry):
        wk, nc = carry
        mx = jnp.max(wk, axis=1, keepdims=True)                     # i-th max
        idx = jnp.min(jnp.where(wk == mx, col, W), axis=1, keepdims=True)
        wk = jnp.where(col == idx, jnp.float32(_NEG), wk)           # remove ONE
        nc = jnp.where(slot == i, mx, nc)                           # store it
        return wk, nc

    nc0 = jnp.full(cand_ref.shape, _NEG, jnp.float32)
    _, new_cand = jax.lax.fori_loop(0, knn, body, (work, nc0))
    cand_ref[...] = new_cand

    # ---- last tile: smooth-hot cross-entropy from the streamed state ----
    @pl.when(kk == last)
    def _():
        lse = m_ref[...] + jnp.log(l_ref[...])                      # (B, 1)
        lpos = lpos_ref[...]
        logsm_pos = lpos - lse
        cand = cand_ref[...]
        real = slot < knn                                           # (1, knn_pad)
        topk_sum = jnp.sum(jnp.where(real, cand, 0.0),
                           axis=1, keepdims=True)                   # sum top-knn negs
        v_knn = jnp.min(jnp.where(real, cand, jnp.float32(-_NEG)),
                        axis=1, keepdims=True)                      # knn-th largest neg
        # Was the positive among the global top-knn?  Ties go to the negative
        # (matches the previous kernel; torch.sort tie order is unspecified).
        pos_sel = (lpos > v_knn).astype(jnp.float32)
        sel_neg_vals = topk_sum - pos_sel * v_knn
        sel_neg_logsm = sel_neg_vals - (knn - pos_sel) * lse
        w_neg = (1.0 - w_pos) / knn
        per_sample = -(w_pos * logsm_pos + w_neg * sel_neg_logsm)   # (B, 1)
        loss_ref[...] = jnp.mean(per_sample).reshape(1, 1)


def _pick_tk(K, D, itemsize, max_tile_bytes=4 * 1024 * 1024):
    """Largest multiple-of-128 divisor of K whose (tk, D) tile fits the budget."""
    if K % 128 != 0:
        return K
    best = 128
    t = 128
    while t <= K:
        if K % t == 0 and t * D * itemsize <= max_tile_bytes:
            best = t
        t += 128
    return best


def _vmem_limit_bytes():
    """Per-generation scoped-VMEM limit: ~3/4 of physical, capped at 100 MiB."""
    cap = 128 * 1024 * 1024
    try:
        cap = int(pltpu.get_tpu_info().vmem_capacity_bytes)
    except Exception:
        pass
    return int(min(cap * 3 // 4, 100 * 1024 * 1024))


def ncl_memory_forward(q, k, memory, label, labels=None, *, T, w_pos, knn,
                       index=0, compute_dtype=jnp.float32, tk=None):
    """Returns (loss, new_memory, new_label, new_index).

    Implements the unlabeled, epoch < hard_negative_start path of
    NCLMemory.forward (NCL loss + circular-queue update).
    NOTE: assumes B > 1 (the torch `squeeze()` B == 1 corner case returns 0).
    """
    B, D = q.shape
    K, D2 = memory.shape
    assert D2 == D and k.shape == (B, D)
    assert 1 <= knn <= K

    if tk is None:
        tk = _pick_tk(K, D, jnp.dtype(memory.dtype).itemsize)
    assert K % tk == 0
    n_tiles = K // tk
    knn_pad = ((knn + 127) // 128) * 128

    kernel = functools.partial(
        _ncl_stream_kernel, inv_T=1.0 / T, w_pos=w_pos, knn=knn,
        knn_pad=knn_pad, compute_dtype=compute_dtype)

    mem_itemsize = jnp.dtype(memory.dtype).itemsize
    cost = pl.CostEstimate(
        flops=2 * B * D * (K + 1)
              + 6 * B * (K + n_tiles * knn_pad) * (knn + 2),
        transcendentals=B * (K + n_tiles),
        bytes_accessed=K * D * mem_itemsize + 2 * B * D * 4 + 4)

    loss = pl.pallas_call(
        kernel,
        grid=(n_tiles,),
        in_specs=[pl.BlockSpec((B, D), lambda kk: (0, 0)),     # q (resident)
                  pl.BlockSpec((B, D), lambda kk: (0, 0)),     # k (resident)
                  pl.BlockSpec((tk, D), lambda kk: (kk, 0))],  # memory tile
        out_specs=pl.BlockSpec((1, 1), lambda kk: (0, 0)),
        out_shape=jax.ShapeDtypeStruct((1, 1), jnp.float32),
        scratch_shapes=[
            pltpu.VMEM((B, D), compute_dtype),      # q * (1/T) (MXU operand)
            pltpu.VMEM((B, 1), jnp.float32),        # l_pos / T
            pltpu.VMEM((B, 1), jnp.float32),        # running max m
            pltpu.VMEM((B, 1), jnp.float32),        # running sum-exp l
            pltpu.VMEM((B, knn_pad), jnp.float32),  # top-knn candidates
        ],
        compiler_params=pltpu.CompilerParams(
            dimension_semantics=("arbitrary",),
            vmem_limit_bytes=_vmem_limit_bytes()),
        cost_estimate=cost,
    )(q, k, memory)[0, 0]

    # ---- update_memory: circular queue write, traced-index safe ----
    # (scatter with modular row ids; in-place when the buffer is donated)
    idx0 = jnp.asarray(index, jnp.int32)
    ids = jnp.mod(idx0 + jnp.arange(B, dtype=jnp.int32), K)
    new_memory = memory.at[ids].set(k.astype(memory.dtype))
    if labels is not None:
        new_label = label.at[ids].set(labels.astype(label.dtype))
    else:
        new_label = label
    new_index = jnp.mod(idx0 + B, K)
    return loss, new_memory, new_label, new_index


def _reference_loss(q, k, memory, *, T, w_pos, knn):
    """Pure-jnp reference of the same path, for a sanity check."""
    l_pos = jnp.sum(q * k, axis=1, keepdims=True)
    l_neg = q @ memory.T
    out = jnp.concatenate([l_pos, l_neg], axis=1) / T
    logsm = jax.nn.log_softmax(out, axis=1)
    topv, topi = jax.lax.top_k(out, knn)
    targets = jnp.zeros_like(out)
    w = jnp.full((out.shape[0], knn), (1.0 - w_pos) / knn)
    targets = jax.vmap(lambda t, idx, ww: t.at[idx].set(ww))(targets, topi, w)
    targets = targets.at[:, 0].set(w_pos)
    loss = -(targets * logsm)
    return jnp.mean(jnp.sum(loss, axis=1))


if __name__ == "__main__":
    # small, NCLMemory-consistent shapes (tk=128 -> 2 memory tiles so the
    # streaming softmax / top-knn path is actually exercised)
    D = 32            # inputSize
    K = 256           # queueSize
    B = 8             # batch
    T = 0.05
    w_pos = 0.2
    knn = 8

    key = jax.random.PRNGKey(0)
    kq, kk_, kmem = jax.random.split(key, 3)
    q = jax.random.normal(kq, (B, D), jnp.float32)
    k = jax.random.normal(kk_, (B, D), jnp.float32)
    q = q / jnp.linalg.norm(q, axis=1, keepdims=True)
    k = k / jnp.linalg.norm(k, axis=1, keepdims=True)

    # memory buffer init: torch.rand(K, D).mul_(2*stdv).add_(-stdv)
    stdv = 1.0 / math.sqrt(D / 3)
    memory = jax.random.uniform(kmem, (K, D), jnp.float32,
                                minval=-stdv, maxval=stdv)
    label = jnp.zeros((K,), jnp.float32) - 1.0

    ref = _reference_loss(q, k, memory, T=T, w_pos=w_pos, knn=knn)

    # ---- bf16 queue + bf16 MXU path (the recommended production config) ----
    memory_bf16 = memory.astype(jnp.bfloat16)
    ref_bf16 = _reference_loss(q, k, memory_bf16.astype(jnp.float32),
                               T=T, w_pos=w_pos, knn=knn)
    loss_b, new_mem_b, _, _ = ncl_memory_forward(
        q, k, memory_bf16, label, labels=None, T=T, w_pos=w_pos, knn=knn,
        index=0, compute_dtype=jnp.bfloat16, tk=128)
    jax.block_until_ready(loss_b)
    assert bool(jnp.isfinite(loss_b)), loss_b
    assert abs(float(loss_b) - float(ref_bf16)) < 0.1, (loss_b, ref_bf16)
    assert jnp.allclose(new_mem_b[:B].astype(jnp.float32),
                        k.astype(jnp.bfloat16).astype(jnp.float32))

    # ---- f32 path under jit with the memory buffer donated (in-place) ----
    @functools.partial(jax.jit, donate_argnums=(2,))
    def fwd(q, k, memory, label, index):
        return ncl_memory_forward(q, k, memory, label, labels=None,
                                  T=T, w_pos=w_pos, knn=knn, index=index,
                                  compute_dtype=jnp.float32, tk=128)

    loss, new_memory, new_label, new_index = fwd(q, k, memory, label,
                                                 jnp.int32(0))
    jax.block_until_ready((loss, new_memory, new_label, new_index))

    assert jnp.allclose(loss, ref, atol=1e-4, rtol=1e-4), (loss, ref)
    # memory update check: first B rows replaced by k, pointer advanced
    assert jnp.allclose(new_memory[:B], k)
    assert int(new_index) == B % K

    print("KERNEL_OK")
</pallas_src>

<mosaic_0001>
module attributes {stable_mosaic.version = 11 : i64} {
  func.func @_ncl_stream_kernel(%arg0: i32, %arg1: memref<8x32xf32, #tpu.memory_space<vmem>>, %arg2: memref<8x32xf32, #tpu.memory_space<vmem>>, %arg3: memref<128x32xbf16, #tpu.memory_space<vmem>>, %arg4: memref<1x1xf32, #tpu.memory_space<vmem>>, %arg5: memref<8x32xbf16, #tpu.memory_space<vmem>>, %arg6: memref<8x1xf32, #tpu.memory_space<vmem>>, %arg7: memref<8x1xf32, #tpu.memory_space<vmem>>, %arg8: memref<8x1xf32, #tpu.memory_space<vmem>>, %arg9: memref<8x128xf32, #tpu.memory_space<vmem>>) attributes {dimension_semantics = [#tpu.dimension_semantics<arbitrary>], iteration_bounds = array<i64: 2>, scalar_prefetch = 0 : i64, scratch_operands = 5 : i64, tpu.core_type = #tpu.core_type<tc>, window_params = [{pipeline_mode = #tpu.pipeline_mode<synchronous>, transform_indices = @transform_0, window_bounds = array<i64: 8, 32>}, {pipeline_mode = #tpu.pipeline_mode<synchronous>, transform_indices = @transform_1, window_bounds = array<i64: 8, 32>}, {transform_indices = @transform_2, window_bounds = array<i64: 128, 32>}, {pipeline_mode = #tpu.pipeline_mode<synchronous>, transform_indices = @transform_3, window_bounds = array<i64: 1, 1>}]} {
    %c0_i32 = arith.constant 0 : i32
    %0 = arith.cmpi eq, %arg0, %c0_i32 : i32
    %1 = arith.extui %0 : i1 to i32
    %c0_i32_0 = arith.constant 0 : i32
    %2 = arith.cmpi ne, %1, %c0_i32_0 : i32
    scf.if %2 {
      %c0_23 = arith.constant 0 : index
      %c0_24 = arith.constant 0 : index
      %33 = vector.load %arg1[%c0_23, %c0_24] : memref<8x32xf32, #tpu.memory_space<vmem>>, vector<8x32xf32>
      %cst_25 = arith.constant 2.000000e+01 : f32
      %34 = vector.broadcast %cst_25 : f32 to vector<8x32xf32>
      %35 = arith.mulf %33, %34 : vector<8x32xf32>
      %36 = arith.truncf %35 : vector<8x32xf32> to vector<8x32xbf16>
      %c0_26 = arith.constant 0 : index
      %c0_27 = arith.constant 0 : index
      %37 = vector.load %arg5[%c0_26, %c0_27] : memref<8x32xbf16, #tpu.memory_space<vmem>>, vector<8x32xbf16>
      tpu.vector_store %arg5[%c0_26, %c0_27], %36 {strides = array<i32>} : memref<8x32xbf16, #tpu.memory_space<vmem>>, vector<8x32xbf16>,
      %c0_28 = arith.constant 0 : index
      %c0_29 = arith.constant 0 : index
      %38 = vector.load %arg2[%c0_28, %c0_29] : memref<8x32xf32, #tpu.memory_space<vmem>>, vector<8x32xf32>
      %39 = arith.mulf %35, %38 : vector<8x32xf32>
      %cst_30 = arith.constant dense<0.000000e+00> : vector<8xf32>
      %40 = vector.multi_reduction <add>, %39, %cst_30 [1] : vector<8x32xf32> to vector<8xf32>
      %41 = vector.shape_cast %40 : vector<8xf32> to vector<8x1xf32>
      %c0_31 = arith.constant 0 : index
      %c0_32 = arith.constant 0 : index
      %42 = vector.load %arg6[%c0_31, %c0_32] : memref<8x1xf32, #tpu.memory_space<vmem>>, vector<8x1xf32>
      tpu.vector_store %arg6[%c0_31, %c0_32], %41 {strides = array<i32>} : memref<8x1xf32, #tpu.memory_space<vmem>>, vector<8x1xf32>,
      %c0_33 = arith.constant 0 : index
      %c0_34 = arith.constant 0 : index
      %43 = vector.load %arg7[%c0_33, %c0_34] : memref<8x1xf32, #tpu.memory_space<vmem>>, vector<8x1xf32>
      tpu.vector_store %arg7[%c0_33, %c0_34], %41 {strides = array<i32>} : memref<8x1xf32, #tpu.memory_space<vmem>>, vector<8x1xf32>,
      %cst_35 = arith.constant 1.000000e+00 : f32
      %44 = vector.broadcast %cst_35 : f32 to vector<8x1xf32>
      %c0_36 = arith.constant 0 : index
      %c0_37 = arith.constant 0 : index
      %45 = vector.load %arg8[%c0_36, %c0_37] : memref<8x1xf32, #tpu.memory_space<vmem>>, vector<8x1xf32>
      tpu.vector_store %arg8[%c0_36, %c0_37], %44 {strides = array<i32>} : memref<8x1xf32, #tpu.memory_space<vmem>>, vector<8x1xf32>,
      %cst_38 = arith.constant -1.000000e+30 : f32
      %46 = vector.broadcast %cst_38 : f32 to vector<8x128xf32>
      %c0_39 = arith.constant 0 : index
      %c0_40 = arith.constant 0 : index
      %47 = vector.load %arg9[%c0_39, %c0_40] : memref<8x128xf32, #tpu.memory_space<vmem>>, vector<8x128xf32>
      tpu.vector_store %arg9[%c0_39, %c0_40], %46 {strides = array<i32>} : memref<8x128xf32, #tpu.memory_space<vmem>>, vector<8x128xf32>,
      %cst_41 = arith.constant 0.000000e+00 : f32
      %48 = vector.broadcast %cst_41 : f32 to vector<1x1xf32>
      %c0_42 = arith.constant 0 : index
      %c0_43 = arith.constant 0 : index
      %49 = vector.load %arg4[%c0_42, %c0_43] : memref<1x1xf32, #tpu.memory_space<vmem>>, vector<1x1xf32>
      tpu.vector_store %arg4[%c0_42, %c0_43], %48 {strides = array<i32>} : memref<1x1xf32, #tpu.memory_space<vmem>>, vector<1x1xf32>,
    } else {
    }
    %c0 = arith.constant 0 : index
    %c0_1 = arith.constant 0 : index
    %3 = vector.load %arg5[%c0, %c0_1] : memref<8x32xbf16, #tpu.memory_space<vmem>>, vector<8x32xbf16>
    %c0_2 = arith.constant 0 : index
    %c0_3 = arith.constant 0 : index
    %4 = vector.load %arg3[%c0_2, %c0_3] : memref<128x32xbf16, #tpu.memory_space<vmem>>, vector<128x32xbf16>
    %cst = arith.constant dense<0.000000e+00> : vector<8x128xf32>
    %5 = tpu.matmul %3, %4, %cst {dimension_numbers = #tpu.dot_dimension_numbers<[1], [1], [0], [0], [0, 0, 1, 0], [], []>} : vector<8x32xbf16>, vector<128x32xbf16>, vector<8x128xf32> -> vector<8x128xf32>
    %c0_4 = arith.constant 0 : index
    %c0_5 = arith.constant 0 : index
    %6 = vector.load %arg7[%c0_4, %c0_5] : memref<8x1xf32, #tpu.memory_space<vmem>>, vector<8x1xf32>
    %cst_6 = arith.constant dense<0xFF800000> : vector<8xf32>
    %7 = vector.multi_reduction <maximumf>, %5, %cst_6 [1] : vector<8x128xf32> to vector<8xf32>
    %8 = vector.shape_cast %7 : vector<8xf32> to vector<8x1xf32>
    %9 = arith.maximumf %6, %8 : vector<8x1xf32>
    %c0_7 = arith.constant 0 : index
    %c0_8 = arith.constant 0 : index
    %10 = vector.load %arg8[%c0_7, %c0_8] : memref<8x1xf32, #tpu.memory_space<vmem>>, vector<8x1xf32>
    %11 = arith.subf %6, %9 : vector<8x1xf32>
    %12 = math.exp %11 : vector<8x1xf32>
    %13 = arith.mulf %10, %12 : vector<8x1xf32>
    %14 = vector.broadcast %9 : vector<8x1xf32> to vector<8x128xf32>
    %15 = arith.subf %5, %14 : vector<8x128xf32>
    %16 = math.exp %15 : vector<8x128xf32>
    %cst_9 = arith.constant dense<0.000000e+00> : vector<8xf32>
    %17 = vector.multi_reduction <add>, %16, %cst_9 [1] : vector<8x128xf32> to vector<8xf32>
    %18 = vector.shape_cast %17 : vector<8xf32> to vector<8x1xf32>
    %19 = arith.addf %13, %18 : vector<8x1xf32>
    %c0_10 = arith.constant 0 : index
    %c0_11 = arith.constant 0 : index
    %20 = vector.load %arg8[%c0_10, %c0_11] : memref<8x1xf32, #tpu.memory_space<vmem>>, vector<8x1xf32>
    tpu.vector_store %arg8[%c0_10, %c0_11], %19 {strides = array<i32>} : memref<8x1xf32, #tpu.memory_space<vmem>>, vector<8x1xf32>,
    %c0_12 = arith.constant 0 : index
    %c0_13 = arith.constant 0 : index
    %21 = vector.load %arg7[%c0_12, %c0_13] : memref<8x1xf32, #tpu.memory_space<vmem>>, vector<8x1xf32>
    tpu.vector_store %arg7[%c0_12, %c0_13], %9 {strides = array<i32>} : memref<8x1xf32, #tpu.memory_space<vmem>>, vector<8x1xf32>,
    %c0_14 = arith.constant 0 : index
    %c0_15 = arith.constant 0 : index
    %22 = vector.load %arg9[%c0_14, %c0_15] : memref<8x128xf32, #tpu.memory_space<vmem>>, vector<8x128xf32>
    %23 = tpu.concatenate %22, %5 in 1 : vector<8x128xf32>, vector<8x128xf32> -> vector<8x256xf32>
    %24 = tpu.iota {dimensions = array<i32: 1>} : vector<1x256xi32>
    %25 = tpu.iota {dimensions = array<i32: 1>} : vector<1x128xi32>
    %cst_16 = arith.constant -1.000000e+30 : f32
    %26 = vector.broadcast %cst_16 : f32 to vector<8x128xf32>
    %c0_i32_17 = arith.constant 0 : i32
    %c8_i32 = arith.constant 8 : i32
    %27 = arith.addi %c0_i32_17, %c8_i32 : i32
    %c1_i32 = arith.constant 1 : i32
    %28:2 = scf.for %arg10 = %c0_i32_17 to %27 step %c1_i32 iter_args(%arg11 = %23, %arg12 = %26) -> (vector<8x256xf32>, vector<8x128xf32>)  : i32 {
      %cst_23 = arith.constant dense<0xFF800000> : vector<8xf32>
      %33 = vector.multi_reduction <maximumf>, %arg11, %cst_23 [1] : vector<8x256xf32> to vector<8xf32>
      %34 = vector.shape_cast %33 : vector<8xf32> to vector<8x1xf32>
      %35 = vector.broadcast %34 : vector<8x1xf32> to vector<8x256xf32>
      %36 = arith.cmpf oeq, %arg11, %35 : vector<8x256xf32>
      %c256_i32 = arith.constant 256 : i32
      %37 = vector.shape_cast %24 : vector<1x256xi32> to vector<1x256xi32>
      %38 = vector.broadcast %37 : vector<1x256xi32> to vector<8x256xi32>
      %39 = vector.broadcast %c256_i32 : i32 to vector<8x256xi32>
      %40 = arith.select %36, %38, %39 : vector<8x256xi1>, vector<8x256xi32>
      %cst_24 = arith.constant dense<2147483647> : vector<8xi32>
      %41 = vector.multi_reduction <minsi>, %40, %cst_24 [1] : vector<8x256xi32> to vector<8xi32>
      %42 = vector.shape_cast %41 : vector<8xi32> to vector<8x1xi32>
      %43 = vector.broadcast %24 : vector<1x256xi32> to vector<8x256xi32>
      %44 = vector.broadcast %42 : vector<8x1xi32> to vector<8x256xi32>
      %45 = arith.cmpi eq, %43, %44 : vector<8x256xi32>
      %cst_25 = arith.constant -1.000000e+30 : f32
      %46 = vector.broadcast %cst_25 : f32 to vector<8x256xf32>
      %47 = arith.select %45, %46, %arg11 : vector<8x256xi1>, vector<8x256xf32>
      %48 = vector.broadcast %arg10 : i32 to vector<1x128xi32>
      %49 = arith.cmpi eq, %25, %48 : vector<1x128xi32>
      %50 = vector.shape_cast %49 : vector<1x128xi1> to vector<1x128xi1>
      %51 = vector.broadcast %50 : vector<1x128xi1> to vector<8x128xi1>
      %52 = vector.shape_cast %34 : vector<8x1xf32> to vector<8x1xf32>
      %53 = vector.broadcast %52 : vector<8x1xf32> to vector<8x128xf32>
      %54 = arith.select %51, %53, %arg12 : vector<8x128xi1>, vector<8x128xf32>
      scf.yield %47, %54 : vector<8x256xf32>, vector<8x128xf32>
    }
    %c8_i32_18 = arith.constant 8 : i32
    %c0_19 = arith.constant 0 : index
    %c0_20 = arith.constant 0 : index
    %29 = vector.load %arg9[%c0_19, %c0_20] : memref<8x128xf32, #tpu.memory_space<vmem>>, vector<8x128xf32>
    tpu.vector_store %arg9[%c0_19, %c0_20], %28#1 {strides = array<i32>} : memref<8x128xf32, #tpu.memory_space<vmem>>, vector<8x128xf32>,
    %c1_i32_21 = arith.constant 1 : i32
    %30 = arith.cmpi eq, %arg0, %c1_i32_21 : i32
    %31 = arith.extui %30 : i1 to i32
    %c0_i32_22 = arith.constant 0 : i32
    %32 = arith.cmpi ne, %31, %c0_i32_22 : i32
    scf.if %32 {
      %c0_23 = arith.constant 0 : index
      %c0_24 = arith.constant 0 : index
      %33 = vector.load %arg7[%c0_23, %c0_24] : memref<8x1xf32, #tpu.memory_space<vmem>>, vector<8x1xf32>
      %c0_25 = arith.constant 0 : index
      %c0_26 = arith.constant 0 : index
      %34 = vector.load %arg8[%c0_25, %c0_26] : memref<8x1xf32, #tpu.memory_space<vmem>>, vector<8x1xf32>
      %35 = math.log %34 : vector<8x1xf32>
      %36 = arith.addf %33, %35 : vector<8x1xf32>
      %c0_27 = arith.constant 0 : index
      %c0_28 = arith.constant 0 : index
      %37 = vector.load %arg6[%c0_27, %c0_28] : memref<8x1xf32, #tpu.memory_space<vmem>>, vector<8x1xf32>
      %38 = arith.subf %37, %36 : vector<8x1xf32>
      %c0_29 = arith.constant 0 : index
      %c0_30 = arith.constant 0 : index
      %39 = vector.load %arg9[%c0_29, %c0_30] : memref<8x128xf32, #tpu.memory_space<vmem>>, vector<8x128xf32>
      %c8_i32_31 = arith.constant 8 : i32
      %40 = vector.broadcast %c8_i32_31 : i32 to vector<1x128xi32>
      %41 = arith.cmpi slt, %25, %40 : vector<1x128xi32>
      %cst_32 = arith.constant 0.000000e+00 : f32
      %42 = vector.shape_cast %41 : vector<1x128xi1> to vector<1x128xi1>
      %43 = vector.broadcast %42 : vector<1x128xi1> to vector<8x128xi1>
      %44 = vector.broadcast %cst_32 : f32 to vector<8x128xf32>
      %45 = arith.select %43, %39, %44 : vector<8x128xi1>, vector<8x128xf32>
      %cst_33 = arith.constant dense<0.000000e+00> : vector<8xf32>
      %46 = vector.multi_reduction <add>, %45, %cst_33 [1] : vector<8x128xf32> to vector<8xf32>
      %47 = vector.shape_cast %46 : vector<8xf32> to vector<8x1xf32>
      %cst_34 = arith.constant 1.000000e+30 : f32
      %48 = vector.shape_cast %41 : vector<1x128xi1> to vector<1x128xi1>
      %49 = vector.broadcast %48 : vector<1x128xi1> to vector<8x128xi1>
      %50 = vector.broadcast %cst_34 : f32 to vector<8x128xf32>
      %51 = arith.select %49, %39, %50 : vector<8x128xi1>, vector<8x128xf32>
      %cst_35 = arith.constant dense<0x7F800000> : vector<8xf32>
      %52 = vector.multi_reduction <minimumf>, %51, %cst_35 [1] : vector<8x128xf32> to vector<8xf32>
      %53 = vector.shape_cast %52 : vector<8xf32> to vector<8x1xf32>
      %54 = arith.cmpf ogt, %37, %53 : vector<8x1xf32>
      %55 = arith.extui %54 : vector<8x1xi1> to vector<8x1xi32>
      %56 = arith.sitofp %55 : vector<8x1xi32> to vector<8x1xf32>
      %57 = arith.mulf %56, %53 : vector<8x1xf32>
      %58 = arith.subf %47, %57 : vector<8x1xf32>
      %cst_36 = arith.constant 8.000000e+00 : f32
      %59 = vector.broadcast %cst_36 : f32 to vector<8x1xf32>
      %60 = arith.subf %59, %56 : vector<8x1xf32>
      %61 = arith.mulf %60, %36 : vector<8x1xf32>
      %62 = arith.subf %58, %61 : vector<8x1xf32>
      %cst_37 = arith.constant 2.000000e-01 : f32
      %63 = vector.broadcast %cst_37 : f32 to vector<8x1xf32>
      %64 = arith.mulf %63, %38 : vector<8x1xf32>
      %cst_38 = arith.constant 1.000000e-01 : f32
      %65 = vector.broadcast %cst_38 : f32 to vector<8x1xf32>
      %66 = arith.mulf %65, %62 : vector<8x1xf32>
      %67 = arith.addf %64, %66 : vector<8x1xf32>
      %cst_39 = arith.constant 0.000000e+00 : f32
      %68 = vector.broadcast %cst_39 : f32 to vector<8x1xf32>
      %69 = arith.subf %68, %67 : vector<8x1xf32>
      %70 = vector.shape_cast %69 : vector<8x1xf32> to vector<1x8x1xf32>
      %cst_40 = arith.constant dense<0.000000e+00> : vector<1xf32>
      %71 = vector.multi_reduction <add>, %70, %cst_40 [1, 2] : vector<1x8x1xf32> to vector<1xf32>
      %72 = vector.shape_cast %71 : vector<1xf32> to vector<1x1x1xf32>
      %73 = vector.extract %72[0, 0, 0] : f32 from vector<1x1x1xf32>
      %cst_41 = arith.constant 8.000000e+00 : f32
      %74 = arith.divf %73, %cst_41 : f32
      %75 = vector.broadcast %74 : f32 to vector<1x1xf32>
      %c0_42 = arith.constant 0 : index
      %c0_43 = arith.constant 0 : index
      %76 = vector.load %arg4[%c0_42, %c0_43] : memref<1x1xf32, #tpu.memory_space<vmem>>, vector<1x1xf32>
      tpu.vector_store %arg4[%c0_42, %c0_43], %75 {strides = array<i32>} : memref<1x1xf32, #tpu.memory_space<vmem>>, vector<1x1xf32>,
    } else {
    }
    return
  }
  func.func @transform_0(%arg0: i32) -> (i32, i32) {
    %c0_i32 = arith.constant 0 : i32
    %c0_i32_0 = arith.constant 0 : i32
    %c0_i32_1 = arith.constant 0 : i32
    return %c0_i32, %c0_i32_0 : i32, i32
  }
  func.func @transform_1(%arg0: i32) -> (i32, i32) {
    %c0_i32 = arith.constant 0 : i32
    %c0_i32_0 = arith.constant 0 : i32
    %c0_i32_1 = arith.constant 0 : i32
    return %c0_i32, %c0_i32_0 : i32, i32
  }
  func.func @transform_2(%arg0: i32) -> (i32, i32) {
    %c0_i32 = arith.constant 0 : i32
    %c0_i32_0 = arith.constant 0 : i32
    return %arg0, %c0_i32 : i32, i32
  }
  func.func @transform_3(%arg0: i32) -> (i32, i32) {
    %c0_i32 = arith.constant 0 : i32
    %c0_i32_0 = arith.constant 0 : i32
    %c0_i32_1 = arith.constant 0 : i32
    return %c0_i32, %c0_i32_0 : i32, i32
  }
}

</mosaic_0001>

<llo_original>
// kernel: tpu_custom_call.1
$region0: #{tpu_custom_call.1}
  #allocation0 [shape = 'u32[]', space=smem, size = 0x4, offset = 0x4, fixed_abs, tag = 'smem constant byte address 0x4 - core index']
  #allocation1 [shape = 'u32[144,128]{1,0:T(1,128)}', space=vmem, size = 0x12000, scoped, tag = 'internal scratch']
  #allocation2 [shape = 'bf16[8,32]{1,0:T(8,128)(2,1)}', space=vmem, size = 0x800, scoped, tag = 'scratch operand']
  #allocation3 [shape = 'f32[8,1]{1,0:T(8,128)}', space=vmem, size = 0x1000, scoped, tag = 'scratch operand']
  #allocation4 [shape = 'f32[8,1]{1,0:T(8,128)}', space=vmem, size = 0x1000, scoped, tag = 'scratch operand']
  #allocation5 [shape = 'f32[8,1]{1,0:T(8,128)}', space=vmem, size = 0x1000, scoped, tag = 'scratch operand']
  #allocation6 [shape = 'f32[8,128]{1,0:T(8,128)}', space=vmem, size = 0x1000, scoped, tag = 'scratch operand']
  %s0 = inlined_call_operand.hbm [shape: f32[8,32], index: 0, kind: input, shape index: {}]
  %s1 = inlined_call_operand.hbm [shape: f32[8,32], index: 1, kind: input, shape index: {}]
  %s2 = inlined_call_operand.hbm [shape: bf16[256,32], index: 2, kind: input, shape index: {}]
  %s3 = inlined_call_operand.hbm [shape: f32[1,1], index: 3, kind: output, shape index: {}]
  %s4 = sld [smem:[#allocation0]]
  $region72: #{tpu_custom_call.1} parent=0
    _
  %s6 = ssub.s32 1, %s4
  %s7 = scalar_select 0, %s6, %s4
  $region1: #{tpu_custom_call.1} parent=0
    #allocation7 [shape = 'u8[4096]{0}', space=vmem, size = 0x1000, scoped, tag = 'input window, operand 0, single buffered']
    #allocation8 [shape = 's32[2]{0}', space=sflag, size = 0x8, scoped, tag = 'scoped memory for tpu_custom_call.1']
    #allocation9 [shape = 's32[2]{0}', space=sflag, size = 0x8, scoped, tag = 'scoped memory for tpu_custom_call.1']
    #allocation10 [shape = 'u8[4096]{0}', space=vmem, size = 0x1000, scoped, tag = 'input window, operand 1, single buffered']
    #allocation11 [shape = 's32[1]{0}', space=sflag, size = 0x4, scoped, tag = 'scoped memory for tpu_custom_call.1']
    #allocation12 [shape = 'u8[65536]{0}', space=vmem, size = 0x10000, scoped, tag = 'input window, operand 2']
    #allocation13 [shape = 'u8[512]{0}', space=vmem, size = 0x400, scoped, tag = 'output window, operand 0, single buffered']
    %8 = vsyncpa [#allocation8], 0
    %9 = vsyncpa [#allocation11], 0
    %10 = vsyncpa [#allocation9], 0
    loop: start=0, step=1, limit=4
    $region2: #{tpu_custom_call.1} parent=1 // loop_pre_header
      _
    $region3: #{tpu_custom_call.1} parent=1 // loop_header
      %s12 = sphi 0, %s16
      %p13 = scmp.ge.s32.totalorder %s12, 4
      %s20 = sphi 0, %s20
      %s22 = sphi 0, %s20
      %s23 = sphi 0, %s22
      %s37 = sphi 0, %s23
      %s41 = sphi 0, %s41
      %s43 = sphi 0, %s41
      %s44 = sphi 0, %s43
      %s58 = sphi 0, %s44
      %s64 = sphi 0, %s66
      %s67 = sphi 0, %s64
      %s68 = sphi 0, %s67
      %s84 = sphi 0, %s68
      %s88 = sphi 0, %s88
      %s90 = sphi 0, %s88
      %s91 = sphi 0, %s90
      %s105 = sphi 0, %s91
    $region4: #{tpu_custom_call.1} parent=1 // loop_header_branch
      %15 = sbr.rel (%p13) target = $region8
    $region5: #{tpu_custom_call.1} parent=1 // loop_body
      %s17 = ssub.s32 %s12, 1
      %s18 = ssub.s32 %s12, 2
      %s19 = sadd.s32 %s12, 1
      %s21 = sadd.s32 %s20, 1
      %p24 = scmp.eq.s32.totalorder %s12, 1
      %p25 = scmp.ne.s32.totalorder %s20, %s22
      %p26 = scmp.eq.s32.totalorder %s12, 0
      %p27 = por %p25, %p26
      %p28 = scmp.ne.s32.totalorder %s20, %s22
      %p29 = scmp.eq.s32.totalorder %s17, 1
      %p30 = por %p28, %p29
      %p31 = scmp.ne.s32.totalorder %s22, %s23
      %p32 = scmp.eq.s32.totalorder %s17, 0
      %p33 = por %p31, %p32
      %p34 = scmp.ne.s32.totalorder %s22, %s23
      %p35 = scmp.eq.s32.totalorder %s18, 1
      %p36 = por %p34, %p35
      %p38 = scmp.ne.s32.totalorder %s23, %s37
      %p39 = scmp.eq.s32.totalorder %s18, 0
      %p40 = por %p38, %p39
      %s42 = sadd.s32 %s41, 1
      %p45 = scmp.eq.s32.totalorder %s12, 1
      %p46 = scmp.ne.s32.totalorder %s41, %s43
      %p47 = scmp.eq.s32.totalorder %s12, 0
      %p48 = por %p46, %p47
      %p49 = scmp.ne.s32.totalorder %s41, %s43
      %p50 = scmp.eq.s32.totalorder %s17, 1
      %p51 = por %p49, %p50
      %p52 = scmp.ne.s32.totalorder %s43, %s44
      %p53 = scmp.eq.s32.totalorder %s17, 0
      %p54 = por %p52, %p53
      %p55 = scmp.ne.s32.totalorder %s43, %s44
      %p56 = scmp.eq.s32.totalorder %s18, 1
      %p57 = por %p55, %p56
      %p59 = scmp.ne.s32.totalorder %s44, %s58
      %p60 = scmp.eq.s32.totalorder %s18, 0
      %p61 = por %p59, %p60
      %s62 = ssub.s32 %s12, %s19
      %p63 = scmp.eq.s32.totalorder %s62, 0
      %s65 = sadd.s32 %s64, 1
      %s66 = scalar_select %p63, %s64, %s65
      %p69 = pneg %p63
      %p70 = scmp.eq.s32.totalorder %s12, 1
      %p71 = por %p69, %p70
      %p72 = scmp.ne.s32.totalorder %s64, %s67
      %p73 = scmp.eq.s32.totalorder %s12, 0
      %p74 = por %p72, %p73
      %p75 = scmp.ne.s32.totalorder %s64, %s67
      %p76 = scmp.eq.s32.totalorder %s17, 1
      %p77 = por %p75, %p76
      %p78 = scmp.ne.s32.totalorder %s67, %s68
      %p79 = scmp.eq.s32.totalorder %s17, 0
      %p80 = por %p78, %p79
      %p81 = scmp.ne.s32.totalorder %s67, %s68
      %p82 = scmp.eq.s32.totalorder %s18, 1
      %p83 = por %p81, %p82
      %p85 = scmp.ne.s32.totalorder %s68, %s84
      %p86 = scmp.eq.s32.totalorder %s18, 0
      %p87 = por %p85, %p86
      %s89 = sadd.s32 %s88, 1
      %p92 = scmp.eq.s32.totalorder %s12, 1
      %p93 = scmp.ne.s32.totalorder %s88, %s90
      %p94 = scmp.eq.s32.totalorder %s12, 0
      %p95 = por %p93, %p94
      %p96 = scmp.ne.s32.totalorder %s88, %s90
      %p97 = scmp.eq.s32.totalorder %s17, 1
      %p98 = por %p96, %p97
      %p99 = scmp.ne.s32.totalorder %s90, %s91
      %p100 = scmp.eq.s32.totalorder %s17, 0
      %p101 = por %p99, %p100
      %p102 = scmp.ne.s32.totalorder %s90, %s91
      %p103 = scmp.eq.s32.totalorder %s18, 1
      %p104 = por %p102, %p103
      %p106 = scmp.ne.s32.totalorder %s91, %s105
      %p107 = scmp.eq.s32.totalorder %s18, 0
      %p108 = por %p106, %p107
      %p109 = scmp.le.s32.totalorder 1, %s12
      %p110 = scmp.lt.s32.totalorder %s12, 3
      %p111 = pnand %p109, %p110
      %p112 = pneg %p111
      // Predicated region
      $region9: #{tpu_custom_call.1} parent=5 // pred_check
        _
      $region10: #{tpu_custom_call.1} parent=5 // pred_check_branch
        %114 = sbr.rel (%p111) target = $region12
      $region11: #{tpu_custom_call.1} parent=5 // pred_region
        %s115 = ssub.s32 %s12, 1
        // Predicated region
        $region13: #{tpu_custom_call.1} parent=11 // pred_check
          %p116 = pneg %p33
        $region14: #{tpu_custom_call.1} parent=11 // pred_check_branch
          %118 = sbr.rel (%p116) target = $region16
        $region15: #{tpu_custom_call.1} parent=11 // pred_region
          %s120 = ssub.s32 128, 128
          %121 = vsyncadd [#allocation8], %s120
          %s123 = sshll.u32 [#allocation7], 4
          %s124 = int_to_ptr.vmem [resolvable:$true] %s123
          %126 = dma.hbm_to_vmem [thread:$0]  %s0, 128, %s124, [#allocation8]
        $region16: #{tpu_custom_call.1} parent=11 // pred_fallthru
          _
        // Predicated region
        $region17: #{tpu_custom_call.1} parent=11 // pred_check
          %p127 = pneg %p54
        $region18: #{tpu_custom_call.1} parent=11 // pred_check_branch
          %129 = sbr.rel (%p127) target = $region20
        $region19: #{tpu_custom_call.1} parent=11 // pred_region
          %s131 = ssub.s32 128, 128
          %132 = vsyncadd [#allocation11], %s131
          %s134 = sshll.u32 [#allocation10], 4
          %s135 = int_to_ptr.vmem [resolvable:$true] %s134
          %137 = dma.hbm_to_vmem [thread:$0]  %s1, 128, %s135, [#allocation11]
        $region20: #{tpu_custom_call.1} parent=11 // pred_fallthru
          _
      $region12: #{tpu_custom_call.1} parent=5 // pred_fallthru
        _
      %p138 = scmp.lt.s32.totalorder %s12, 2
      // Predicated region
      $region21: #{tpu_custom_call.1} parent=5 // pred_check
        %p139 = pneg %p138
      $region22: #{tpu_custom_call.1} parent=5 // pred_check_branch
        %141 = sbr.rel (%p139) target = $region24
      $region23: #{tpu_custom_call.1} parent=5 // pred_region
        // Predicated region
        $region25: #{tpu_custom_call.1} parent=23 // pred_check
          %p142 = pneg %p74
        $region26: #{tpu_custom_call.1} parent=23 // pred_check_branch
          %144 = sbr.rel (%p142) target = $region28
        $region27: #{tpu_custom_call.1} parent=23 // pred_region
          %s145 = sand.u32 %s12, 1
          %s146 = scalar_lea.sflag [#allocation8], %s145
          %s147 = sand.u32 %s64, 1
          %s148 = smul.addr %s147, 64
          %s149 = scalar_lea.vmem [#allocation12], %s148
          %s150 = smul.u32 16, %s12
          %s152 = ssub.s32 1024, 1024
          %153 = vsyncadd %s146, %s152
          %s154 = smul.addr %s150, 64
          %s155 = scalar_lea.hbm %s2, %s154
          %s156 = sshll.u32 %s149, 4
          %s157 = int_to_ptr.vmem [resolvable:$true] %s156
          %162 = dma.hbm_to_vmem [thread:$0]  %s155, 1024, %s157, %s146, 64, 64, 4
        $region28: #{tpu_custom_call.1} parent=23 // pred_fallthru
          _
      $region24: #{tpu_custom_call.1} parent=5 // pred_fallthru
        _
      %p163 = scmp.le.s32.totalorder 1, %s12
      %p164 = scmp.lt.s32.totalorder %s12, 3
      %p165 = pnand %p163, %p164
      %p166 = pneg %p165
      // Predicated region
      $region29: #{tpu_custom_call.1} parent=5 // pred_check
        _
      $region30: #{tpu_custom_call.1} parent=5 // pred_check_branch
        %168 = sbr.rel (%p165) target = $region32
      $region31: #{tpu_custom_call.1} parent=5 // pred_region
        %s169 = ssub.s32 %s12, 1
        // Predicated region
        $region33: #{tpu_custom_call.1} parent=31 // pred_check
          %p170 = pneg %p33
        $region34: #{tpu_custom_call.1} parent=31 // pred_check_branch
          %172 = sbr.rel (%p170) target = $region36
        $region35: #{tpu_custom_call.1} parent=31 // pred_region
          %173 = dma.done [#allocation8], 128
        $region36: #{tpu_custom_call.1} parent=31 // pred_fallthru
          _
        // Predicated region
        $region37: #{tpu_custom_call.1} parent=31 // pred_check
          %p174 = pneg %p54
        $region38: #{tpu_custom_call.1} parent=31 // pred_check_branch
          %176 = sbr.rel (%p174) target = $region40
        $region39: #{tpu_custom_call.1} parent=31 // pred_region
          %177 = dma.done [#allocation11], 128
        $region40: #{tpu_custom_call.1} parent=31 // pred_fallthru
          _
        %s178 = sand.u32 %s17, 1
        %s179 = scalar_lea.sflag [#allocation8], %s178
        %s180 = sand.u32 %s67, 1
        %s181 = smul.addr %s180, 64
        %s182 = scalar_lea.vmem [#allocation12], %s181
        // Predicated region
        $region41: #{tpu_custom_call.1} parent=31 // pred_check
          %p183 = pneg %p80
        $region42: #{tpu_custom_call.1} parent=31 // pred_check_branch
          %185 = sbr.rel (%p183) target = $region44
        $region43: #{tpu_custom_call.1} parent=31 // pred_region
          %186 = dma.done %s179, 1024
        $region44: #{tpu_custom_call.1} parent=31 // pred_fallthru
          _
        %p187 = pneg %p33
        %p188 = pneg %p30
        %p189 = pneg %p54
        %p190 = pneg %p51
        %s191 = sand.u32 %s17, 1
        %s192 = scalar_lea.sflag [#allocation8], %s191
        %s193 = sand.u32 %s67, 1
        %s194 = smul.addr %s193, 64
        %s195 = scalar_lea.vmem [#allocation12], %s194
        %p196 = pneg %p80
        %p197 = pneg %p77
        %p198 = pneg %p101
        %p199 = pneg %p98
        %s200 = smul.u32 16, %s17
        %p202 = scmp.eq.s32.totalorder %s17, 0
        // Predicated region
        $region45: #{tpu_custom_call.1} parent=31 // pred_check
          %p203 = pneg %p202
        $region46: #{tpu_custom_call.1} parent=31 // pred_check_branch
          %205 = sbr.rel (%p203) target = $region48
        $region47: #{tpu_custom_call.1} parent=31 // pred_region
          %v206 = vld [vmem:[#allocation7] sm:$0xff]
          %v207 = vmul.f32 %v206, 20.0
          %v208 = vpack.c.bf16 %v207, %v207
          %vm209 = vcmask 257024
          %210 = vst.msk [vmem:[#allocation2] sm:$0xf] %vm209, %v208
          %v211 = vld [vmem:[#allocation10] sm:$0xff]
          %v212 = vmul.f32 %v207, %v211
          %vm213 = vcmask 261120
          %v214 = vsel %vm213, %v212, 0.0
          %215 = vadd.xlane.f32.xlu0 %v214
          %v216 = vpop.xlane.xlu0 %215
          %vm217 = vcmask 7168
          %218 = vst.msk [vmem:[#allocation3] sm:$0xff] %vm217, %v216
          %219 = vst.msk [vmem:[#allocation4] sm:$0xff] %vm217, %v216
          %220 = vst.msk [vmem:[#allocation5] sm:$0xff] %vm217, 1.0
          %221 = vst [vmem:[#allocation6] sm:$0xff] -1e+30
          %vm222 = vcmask 0
          %223 = vst.msk [vmem:[#allocation13] sm:$0x1] %vm222, 0.0
        $region48: #{tpu_custom_call.1} parent=31 // pred_fallthru
          _
        %v224 = vld [vmem:[#allocation2] sm:$0xf]
        %v225 = vld [vmem:[%s182] sm:$0xf]
        %v226 = vld [vmem:[%s182 + $0x4] sm:$0xf]
        %v227 = vld [vmem:[%s182 + $0x8] sm:$0xf]
        %v228 = vld [vmem:[%s182 + $0xc] sm:$0xf]
        %v229 = vld [vmem:[%s182 + $0x10] sm:$0xf]
        %v230 = vld [vmem:[%s182 + $0x14] sm:$0xf]
        %v231 = vld [vmem:[%s182 + $0x18] sm:$0xf]
        %v232 = vld [vmem:[%s182 + $0x1c] sm:$0xf]
        %v233 = vld [vmem:[%s182 + $0x20] sm:$0xf]
        %v234 = vld [vmem:[%s182 + $0x24] sm:$0xf]
        %v235 = vld [vmem:[%s182 + $0x28] sm:$0xf]
        %v236 = vld [vmem:[%s182 + $0x2c] sm:$0xf]
        %v237 = vld [vmem:[%s182 + $0x30] sm:$0xf]
        %v238 = vld [vmem:[%s182 + $0x34] sm:$0xf]
        %v239 = vld [vmem:[%s182 + $0x38] sm:$0xf]
        %v240 = vld [vmem:[%s182 + $0x3c] sm:$0xf]
        %v257 = vunpack.c.l.b16 %v225
        %v258 = vunpack.c.l.b16 %v226
        %v259 = vunpack.c.l.b16 %v227
        %v260 = vunpack.c.l.b16 %v228
        %v261 = vunpack.c.l.b16 %v229
        %v262 = vunpack.c.l.b16 %v230
        %v263 = vunpack.c.l.b16 %v231
        %v264 = vunpack.c.l.b16 %v232
        %v265 = vunpack.c.l.b16 %v233
        %v266 = vunpack.c.l.b16 %v234
        %v267 = vunpack.c.l.b16 %v235
        %v268 = vunpack.c.l.b16 %v236
        %v269 = vunpack.c.l.b16 %v237
        %v270 = vunpack.c.l.b16 %v238
        %v271 = vunpack.c.l.b16 %v239
        %v272 = vunpack.c.l.b16 %v240
        %v273 = vpack.c.b16 %v258, %v257
        %v274 = vpack.c.b16 %v260, %v259
        %v275 = vpack.c.b16 %v262, %v261
        %v276 = vpack.c.b16 %v264, %v263
        %v277 = vpack.c.b16 %v266, %v265
        %v278 = vpack.c.b16 %v268, %v267
        %v279 = vpack.c.b16 %v270, %v269
        %v280 = vpack.c.b16 %v272, %v271
        %vm281 = vcmask 261120
        %v283 = vsel %vm281, %v224, 0
        %v286 = vsel %vm281, %v273, 0
        %v289 = vsel %vm281, %v274, 0
        %v292 = vsel %vm281, %v275, 0
        %v295 = vsel %vm281, %v276, 0
        %v298 = vsel %vm281, %v277, 0
        %v301 = vsel %vm281, %v278, 0
        %v304 = vsel %vm281, %v279, 0
        %v307 = vsel %vm281, %v280, 0
        %309 = vmatprep.subr.bf16.mxu0 0
        %310 = vmatpush1.bf16.xpose.msra.mxu0 %v286
        %311 = vmatprep.subr.bf16.mxu0 0
        %312 = vmatpush1.bf16.xpose.msra.mxu0 %v289
        %313 = vmatprep.subr.bf16.mxu0 0
        %314 = vmatpush1.bf16.xpose.msra.mxu0 %v292
        %315 = vmatprep.subr.bf16.mxu0 0
        %316 = vmatpush1.bf16.xpose.msra.mxu0 %v295
        %317 = vmatprep.subr.bf16.mxu0 0
        %318 = vmatpush1.bf16.xpose.msra.mxu0 %v298
        %319 = vmatprep.subr.bf16.mxu0 0
        %320 = vmatpush1.bf16.xpose.msra.mxu0 %v301
        %321 = vmatprep.subr.bf16.mxu0 0
        %322 = vmatpush1.bf16.xpose.msra.mxu0 %v304
        %323 = vmatprep.subr.bf16.mxu0 0
        %324 = vmatpush1.bf16.xpose.msra.mxu0 %v307
        %325 = vmatprep.subr.bf16.mxu0 0
        %326 = vmatpush1.bf16.xpose.msra.mxu0 0
        %327 = vmatprep.subr.bf16.mxu0 0
        %328 = vmatpush1.bf16.xpose.msra.mxu0 0
        %329 = vmatprep.subr.bf16.mxu0 0
        %330 = vmatpush1.bf16.xpose.msra.mxu0 0
        %331 = vmatprep.subr.bf16.mxu0 0
        %332 = vmatpush1.bf16.xpose.msra.mxu0 0
        %333 = vmatprep.subr.bf16.mxu0 0
        %334 = vmatpush1.bf16.xpose.msra.mxu0 0
        %335 = vmatprep.subr.bf16.mxu0 0
        %336 = vmatpush1.bf16.xpose.msra.mxu0 0
        %337 = vmatprep.subr.bf16.mxu0 0
        %338 = vmatpush1.bf16.xpose.msra.mxu0 0
        %339 = vmatprep.subr.bf16.mxu0 0
        %340 = vmatpush1.bf16.xpose.msra.mxu0 0
        %341 = vmatprep.mubr.bf16.mxu0 0
        %342 = vmatmul.mubr.bf16.gmra.mrb[0].mxu0 %v283
        %v343 = vpop.f32.mrb[0].mxu0
        %v344 = vadd.f32 0.0, %v343
        %v345 = vpop.f32.mrb[0].mxu0
        %v346 = vpop.f32.mrb[0].mxu0
        %v347 = vpop.f32.mrb[0].mxu0
        %348 = vdwg.mxu0
        %v349 = vld [vmem:[#allocation4] sm:$0xff]
        %350 = vmax.xlane.f32.xlu0 %v344
        %v351 = vpop.xlane.xlu0 %350
        %v352 = vmax.f32 %v349, %v351
        %v353 = vld [vmem:[#allocation5] sm:$0xff]
        %v354 = vsub.f32 %v349, %v352
        %v355 = vmul.f32 %v354, 1.442695
        %v356 = vpow.pop %v355
        %v357 = vmul.f32 %v353, %v356
        %359 = vset.pattern.permute.xlu0 0
        %360 = vperm.xlu0 %359, %v352
        %v361 = vpop.permute.xlu0 %360
        %v363 = vsub.f32 %v344, %v361
        %v364 = vmul.f32 %v363, 1.442695
        %v365 = vpow.pop %v364
        %366 = vadd.xlane.f32.xlu0 %v365
        %v367 = vpop.xlane.xlu0 %366
        %v368 = vadd.f32 %v357, %v367
        %vm369 = vcmask 7168
        %370 = vst.msk [vmem:[#allocation5] sm:$0xff] %vm369, %v368
        %371 = vst.msk [vmem:[#allocation4] sm:$0xff] %vm369, %v352
        %v372 = vld [vmem:[#allocation6] sm:$0xff]
        %v373 = vlaneseq
        %v374 = vand.u32 %v373, 127
        %v375 = vadd.s32 %v374, 128
        loop: start=0, step=1, limit=8
        $region49: #{tpu_custom_call.1} parent=31 // loop_pre_header
          _
        $region50: #{tpu_custom_call.1} parent=31 // loop_header
          %s377 = sphi 0, %s381
          %p378 = scmp.ge.s32.totalorder %s377, 8
          %v382 = vphi %v372, %v410
          %v383 = vphi %v344, %v411
          %v384 = vphi -1e+30, %v416
        $region51: #{tpu_custom_call.1} parent=31 // loop_header_branch
          %380 = sbr.rel (%p378) target = $region55
        $region52: #{tpu_custom_call.1} parent=31 // loop_body
          %v385 = vmax.f32 %v382, %v383
          %386 = vmax.xlane.f32.xlu0 %v385
          %v387 = vpop.xlane.xlu0 %386
          %vm388 = vcmp.eq.f32.partialorder %v382, %v387
          %vm389 = vcmp.eq.f32.partialorder %v383, %v387
          %v390 = vsel %vm388, %v374, 256
          %v391 = vsel %vm389, %v375, 256
          %vm392 = vcmp.lt.s32.totalorder %v390, %v391
          %v393 = vsel %vm392, %v390, %v391
          %v394 = vand.u32 %v393, 65535
          %v395 = vshra.s32 %v393, 16
          %v396 = vcvt.s32.f32 %v394
          %v397 = vcvt.s32.f32 %v395
          %398 = vmin.xlane.f32.xlu0 %v397
          %v399 = vpop.xlane.xlu0 %398
          %vm400 = vcmp.eq.f32.partialorder %v397, %v399
          %v401 = vsel %vm400, %v396, inf
          %402 = vmin.xlane.f32.xlu0 %v401
          %v403 = vpop.xlane.xlu0 %402
          %v404 = vcvt.f32.s32 %v403
          %v405 = vcvt.f32.s32 %v399
          %v406 = vshll.u32 %v405, 16
          %v407 = vadd.s32 %v406, %v404
          %vm408 = vcmp.eq.s32.totalorder %v374, %v407
          %vm409 = vcmp.eq.s32.totalorder %v375, %v407
          %v410 = vsel %vm408, -1e+30, %v382
          %v411 = vsel %vm409, -1e+30, %v383
          %v412 = vstv %s377
          %vm413 = vcmp.eq.s32.totalorder %v374, %v412
          %v414 = vsel %vm413, 1, 0
          %vm415 = vcmp.eq.s32.totalorder %v414, 1
          %v416 = vsel %vm415, %v387, %v384
        $region53: #{tpu_custom_call.1} parent=31 // loop_footer
          %s381 = sadd.s32 1, %s377
        $region54: #{tpu_custom_call.1} parent=31 // loop_footer_branch
          %376 = sbr.rel target = $region50
        $region55: #{tpu_custom_call.1} parent=31 // loop_exit
          _
        %417 = vst [vmem:[#allocation6] sm:$0xff] %v384
        %p418 = scmp.eq.s32.totalorder %s17, 1
        // Predicated region
        $region56: #{tpu_custom_call.1} parent=31 // pred_check
          %p419 = pneg %p418
        $region57: #{tpu_custom_call.1} parent=31 // pred_check_branch
          %421 = sbr.rel (%p419) target = $region59
        $region58: #{tpu_custom_call.1} parent=31 // pred_region
          %v422 = vld [vmem:[#allocation4] sm:$0xff]
          %v423 = vld [vmem:[#allocation5] sm:$0xff]
          %v424 = vlog2.pop %v423
          %v425 = vmul.f32 %v424, 0.6931472
          %v426 = vadd.f32 %v422, %v425
          %v427 = vld [vmem:[#allocation3] sm:$0xff]
          %v428 = vsub.f32 %v427, %v426
          %v429 = vld [vmem:[#allocation6] sm:$0xff]
          %vm430 = vcmp.lt.s32.totalorder %v374, 8
          %v431 = vsel %vm430, 1, 0
          %vm432 = vcmp.eq.s32.totalorder %v431, 1
          %v433 = vsel %vm432, %v429, 0.0
          %434 = vadd.xlane.f32.xlu0 %v433
          %v435 = vpop.xlane.xlu0 %434
          %v436 = vsel %vm432, %v429, 1e+30
          %437 = vmin.xlane.f32.xlu0 %v436
          %v438 = vpop.xlane.xlu0 %437
          %vm439 = vcmp.gt.f32.partialorder %v427, %v438
          %v440 = vsel %vm439, 1, 0
          %v441 = vcvt.s32.f32 %v440
          %v442 = vmul.f32 %v441, %v438
          %v443 = vsub.f32 %v435, %v442
          %v444 = vsub.f32 8.0, %v441
          %v445 = vmul.f32 %v444, %v426
          %v446 = vsub.f32 %v443, %v445
          %v447 = vmul.f32 %v428, 0.2
          %v448 = vmul.f32 %v446, 0.1
          %v449 = vadd.f32 %v447, %v448
          %v450 = vsub.f32 0.0, %v449
          %v451 = vsel %vm369, %v450, 0.0
          %452 = vadd.xlane.f32.xlu0 %v451
          %v453 = vpop.xlane.xlu0 %452
          %v454 = vrot.slane %v453, 4
          %v455 = vadd.f32 %v453, %v454
          %v456 = vrot.slane %v455, 2
          %v457 = vadd.f32 %v455, %v456
          %v458 = vrot.slane %v457, 1
          %v459 = vadd.f32 %v457, %v458
          %s460 = vtos %v459
          %v461 = vrcp.pop 8.0
          %s462 = vtos %v461
          %s463 = smul.f32 %s460, %s462
          %v464 = vstv %s463
          %vm465 = vcmask 0
          %466 = vst.msk [vmem:[#allocation13] sm:$0x1] %vm465, %v464
        $region59: #{tpu_custom_call.1} parent=31 // pred_fallthru
          _
        // Predicated region
        $region60: #{tpu_custom_call.1} parent=31 // pred_check
          %p467 = pneg %p98
        $region61: #{tpu_custom_call.1} parent=31 // pred_check_branch
          %469 = sbr.rel (%p467) target = $region63
        $region62: #{tpu_custom_call.1} parent=31 // pred_region
          %s471 = ssub.s32 16, 16
          %472 = vsyncadd [#allocation9], %s471
          %s474 = sshll.u32 [#allocation13], 4
          %s475 = int_to_ptr.vmem [resolvable:$true] %s474
          %477 = dma.vmem_to_hbm [thread:$0]  %s475, 16, %s3, [#allocation9]
        $region63: #{tpu_custom_call.1} parent=31 // pred_fallthru
          _
        // Predicated region
        $region64: #{tpu_custom_call.1} parent=31 // pred_check
          %p478 = pneg %p98
        $region65: #{tpu_custom_call.1} parent=31 // pred_check_branch
          %480 = sbr.rel (%p478) target = $region67
        $region66: #{tpu_custom_call.1} parent=31 // pred_region
          %481 = dma.done [#allocation9], 16
        $region67: #{tpu_custom_call.1} parent=31 // pred_fallthru
          _
      $region32: #{tpu_custom_call.1} parent=5 // pred_fallthru
        _
      %p482 = scmp.le.s32.totalorder 2, %s12
      // Predicated region
      $region68: #{tpu_custom_call.1} parent=5 // pred_check
        %p483 = pneg %p482
      $region69: #{tpu_custom_call.1} parent=5 // pred_check_branch
        %485 = sbr.rel (%p483) target = $region71
      $region70: #{tpu_custom_call.1} parent=5 // pred_region
        %s486 = ssub.s32 %s12, 2
      $region71: #{tpu_custom_call.1} parent=5 // pred_fallthru
        _
    $region6: #{tpu_custom_call.1} parent=1 // loop_footer
      %s16 = sadd.s32 1, %s12
    $region7: #{tpu_custom_call.1} parent=1 // loop_footer_branch
      %11 = sbr.rel target = $region3
    $region8: #{tpu_custom_call.1} parent=1 // loop_exit
      _
    %487 = vsyncpa [#allocation8], 1
    %s488 = scalar_lea.sflag [#allocation8], 1
    %489 = vsyncpa %s488, 1
    %490 = vsyncpa [#allocation11], 1
    %491 = vsyncpa [#allocation9], 1
    %s492 = scalar_lea.sflag [#allocation9], 1
    %493 = vsyncpa %s492, 1

</llo_original>
